<compile_context>
chip_gen: v7x
topology: tpu7x:2x2x1
jax: 0.10.0
libtpu: 0.0.40
codegen_flags: <defaults>
</compile_context>

<pallas_src>
import jax
import jax.numpy as jnp
from jax import lax
from jax.experimental import pallas as pl
from jax.experimental.pallas import tpu as pltpu


def _encoding_kernel(idx_ref, enc_ref, out_ref):
    """One output tile: out = one_hot(idx) @ block_diag(encodings).

    idx_ref : VMEM (TBo, r) int32 — indices pre-offset by slot*E (-1 if invalid)
    enc_ref : VMEM (r*E, r*F) float32 block-diagonal embedding table
    out_ref : VMEM (TBo, r*F) float32, lane-dense output tile
    """
    idx = idx_ref[...]                       # (TBo, r)
    tbo, repack = idx.shape
    table_rows = enc_ref.shape[0]            # r*E

    cols = lax.broadcasted_iota(jnp.int32, (tbo, table_rows), 1)
    oh = jnp.zeros((tbo, table_rows), jnp.float32)
    for k in range(repack):                  # r <= 4, static, slots are disjoint
        oh += (cols == idx[:, k][:, None]).astype(jnp.float32)

    out_ref[...] = jnp.dot(oh, enc_ref[...], preferred_element_type=jnp.float32)


def encoding_forward(element_list, encodings, *, ghost_killer, block_rows=1024):
    """Pallas equivalent of Encoding.forward.

    element_list : int array of any shape (indices into the table)
    encodings    : (element_number, feature_number) float table
    returns      : (N, feature_number) float32, N = element_list.size
    """
    E, F = encodings.shape
    idx = element_list.reshape(-1).astype(jnp.int32)
    n = idx.shape[0]

    # Lane-repacking factor: fold r consecutive output rows into one 128-lane row.
    if F < 128 and 128 % F == 0:
        r = 128 // F
        if r * E * r * F * 4 > (8 << 20):    # don't blow up VMEM with the r^2 table
            r = 1
    else:
        r = 1

    base = 8 * r                             # minimum tile = 8 output sublanes
    block_rows = min(block_rows, pl.cdiv(n, base) * base)
    block_rows = max(base, (block_rows // base) * base)
    n_pad = pl.cdiv(n, block_rows) * block_rows
    if n_pad != n:                           # only pad when the grid needs it
        idx = jnp.concatenate([idx, jnp.zeros((n_pad - n,), jnp.int32)])

    # Pre-offset indices: slot k maps element e -> k*E + e in the block-diag
    # table; invalid (out-of-range) indices become -1 -> all-zero output row.
    idx2 = idx.reshape(n_pad // r, r)
    offs = (jnp.arange(r, dtype=jnp.int32) * E)[None, :]
    valid = (idx2 >= 0) & (idx2 < E)
    idx_off = jnp.where(valid, idx2 + offs, -1)

    # Build the (r*E, r*F) block-diagonal table once (tiny XLA op, wrapper side).
    enc = encodings.astype(jnp.float32)
    if ghost_killer:
        enc = enc.at[0].set(0.0)             # index 0 -> zero vector
    table = enc if r == 1 else jnp.kron(jnp.eye(r, dtype=jnp.float32), enc)

    tbo = block_rows // r
    grid = (n_pad // block_rows,)

    # Raise the scoped VMEM limit only when the resident table / tiles need it.
    table_bytes = int(table.size) * 4
    need = 2 * (table_bytes + tbo * r * F * 4 + tbo * r * 4) + (1 << 20)
    vmem_limit = int(min(max(need, 32 << 20), 64 << 20)) if need > (16 << 20) else None
    # TODO(synk): for tables that don't fit VMEM (> ~50 MiB on v7x), keep the
    # table in HBM (pl.ANY) and accumulate over E-tiles instead of keeping it resident.

    out = pl.pallas_call(
        _encoding_kernel,
        out_shape=jax.ShapeDtypeStruct((n_pad // r, r * F), jnp.float32),
        grid_spec=pltpu.PrefetchScalarGridSpec(
            num_scalar_prefetch=0,
            grid=grid,
            in_specs=[
                pl.BlockSpec((tbo, r), lambda i: (i, 0)),          # index tile (VMEM)
                pl.BlockSpec((r * E, r * F), lambda i: (0, 0)),    # table, resident
            ],
            out_specs=pl.BlockSpec((tbo, r * F), lambda i: (i, 0)),
        ),
        compiler_params=pltpu.CompilerParams(
            dimension_semantics=("parallel",),   # tiles independent -> both TCs on v7x
            vmem_limit_bytes=vmem_limit,
        ),
    )(idx_off, table)

    out = out.reshape(n_pad, F)                  # free view: contiguous row-major
    return out if n_pad == n else out[:n]


if __name__ == "__main__":
    # Module hyper-parameters (small, consistent with the forward pass).
    feature_number = 32
    element_number = 10
    ghost_killer = True

    key = jax.random.PRNGKey(0)
    k_enc, k_idx = jax.random.split(key)

    # Deterministic parameter init (torch.randn equivalent).
    encodings = jax.random.normal(
        k_enc, (element_number, feature_number), dtype=jnp.float32
    )

    # element_list: batch of index tensors, e.g. shape (2, 8) -> N = 16.
    element_list = jax.random.randint(
        k_idx, (2, 8), minval=0, maxval=element_number, dtype=jnp.int32
    )

    result = encoding_forward(element_list, encodings, ghost_killer=ghost_killer)
    result = jax.block_until_ready(result)

    # Pure-JAX reference check.
    flat = element_list.reshape(-1)
    ref = encodings[flat]
    if ghost_killer:
        ref = jnp.where((flat == 0)[:, None], 0.0, ref)
    assert result.shape == (flat.shape[0], feature_number)
    assert jnp.allclose(result, ref, atol=1e-6), "mismatch vs reference"

    print("KERNEL_OK")
</pallas_src>

<mosaic_0001>
module attributes {stable_mosaic.version = 11 : i64} {
  func.func @_encoding_kernel(%arg0: i32, %arg1: memref<8x4xi32, #tpu.memory_space<vmem>>, %arg2: memref<40x128xf32, #tpu.memory_space<vmem>>, %arg3: memref<8x128xf32, #tpu.memory_space<vmem>>) attributes {dimension_semantics = [#tpu.dimension_semantics<parallel>], iteration_bounds = array<i64: 1>, scalar_prefetch = 0 : i64, scratch_operands = 0 : i64, tpu.core_type = #tpu.core_type<tc>, window_params = [{transform_indices = @transform_0, window_bounds = array<i64: 8, 4>}, {pipeline_mode = #tpu.pipeline_mode<synchronous>, transform_indices = @transform_1, window_bounds = array<i64: 40, 128>}, {transform_indices = @transform_2, window_bounds = array<i64: 8, 128>}]} {
    %c0 = arith.constant 0 : index
    %c0_0 = arith.constant 0 : index
    %0 = vector.load %arg1[%c0, %c0_0] : memref<8x4xi32, #tpu.memory_space<vmem>>, vector<8x4xi32>
    %1 = tpu.iota {dimensions = array<i32: 1>} : vector<8x40xi32>
    %cst = arith.constant 0.000000e+00 : f32
    %2 = vector.broadcast %cst : f32 to vector<8x40xf32>
    %3 = vector.extract_strided_slice %0 {offsets = [0, 0], sizes = [8, 1], strides = [1, 1]} : vector<8x4xi32> to vector<8x1xi32>
    %4 = vector.shape_cast %3 : vector<8x1xi32> to vector<8xi32>
    %5 = vector.shape_cast %4 : vector<8xi32> to vector<8x1xi32>
    %6 = vector.broadcast %5 : vector<8x1xi32> to vector<8x40xi32>
    %7 = arith.cmpi eq, %1, %6 : vector<8x40xi32>
    %8 = arith.extui %7 : vector<8x40xi1> to vector<8x40xi32>
    %9 = arith.sitofp %8 : vector<8x40xi32> to vector<8x40xf32>
    %10 = arith.addf %2, %9 : vector<8x40xf32>
    %11 = vector.extract_strided_slice %0 {offsets = [0, 1], sizes = [8, 1], strides = [1, 1]} : vector<8x4xi32> to vector<8x1xi32>
    %12 = vector.shape_cast %11 : vector<8x1xi32> to vector<8xi32>
    %13 = vector.shape_cast %12 : vector<8xi32> to vector<8x1xi32>
    %14 = vector.broadcast %13 : vector<8x1xi32> to vector<8x40xi32>
    %15 = arith.cmpi eq, %1, %14 : vector<8x40xi32>
    %16 = arith.extui %15 : vector<8x40xi1> to vector<8x40xi32>
    %17 = arith.sitofp %16 : vector<8x40xi32> to vector<8x40xf32>
    %18 = arith.addf %10, %17 : vector<8x40xf32>
    %19 = vector.extract_strided_slice %0 {offsets = [0, 2], sizes = [8, 1], strides = [1, 1]} : vector<8x4xi32> to vector<8x1xi32>
    %20 = vector.shape_cast %19 : vector<8x1xi32> to vector<8xi32>
    %21 = vector.shape_cast %20 : vector<8xi32> to vector<8x1xi32>
    %22 = vector.broadcast %21 : vector<8x1xi32> to vector<8x40xi32>
    %23 = arith.cmpi eq, %1, %22 : vector<8x40xi32>
    %24 = arith.extui %23 : vector<8x40xi1> to vector<8x40xi32>
    %25 = arith.sitofp %24 : vector<8x40xi32> to vector<8x40xf32>
    %26 = arith.addf %18, %25 : vector<8x40xf32>
    %27 = vector.extract_strided_slice %0 {offsets = [0, 3], sizes = [8, 1], strides = [1, 1]} : vector<8x4xi32> to vector<8x1xi32>
    %28 = vector.shape_cast %27 : vector<8x1xi32> to vector<8xi32>
    %29 = vector.shape_cast %28 : vector<8xi32> to vector<8x1xi32>
    %30 = vector.broadcast %29 : vector<8x1xi32> to vector<8x40xi32>
    %31 = arith.cmpi eq, %1, %30 : vector<8x40xi32>
    %32 = arith.extui %31 : vector<8x40xi1> to vector<8x40xi32>
    %33 = arith.sitofp %32 : vector<8x40xi32> to vector<8x40xf32>
    %34 = arith.addf %26, %33 : vector<8x40xf32>
    %c0_1 = arith.constant 0 : index
    %c0_2 = arith.constant 0 : index
    %35 = vector.load %arg2[%c0_1, %c0_2] : memref<40x128xf32, #tpu.memory_space<vmem>>, vector<40x128xf32>
    %cst_3 = arith.constant dense<0.000000e+00> : vector<8x128xf32>
    %36 = tpu.matmul %34, %35, %cst_3 {dimension_numbers = #tpu.dot_dimension_numbers<[1], [0], [0], [1], [0, 0, 1, 1], [], []>} : vector<8x40xf32>, vector<40x128xf32>, vector<8x128xf32> -> vector<8x128xf32>
    %c0_4 = arith.constant 0 : index
    %c0_5 = arith.constant 0 : index
    %37 = vector.load %arg3[%c0_4, %c0_5] : memref<8x128xf32, #tpu.memory_space<vmem>>, vector<8x128xf32>
    tpu.vector_store %arg3[%c0_4, %c0_5], %36 {strides = array<i32>} : memref<8x128xf32, #tpu.memory_space<vmem>>, vector<8x128xf32>,
    return
  }
  func.func @transform_0(%arg0: i32) -> (i32, i32) {
    %c0_i32 = arith.constant 0 : i32
    %c0_i32_0 = arith.constant 0 : i32
    return %arg0, %c0_i32 : i32, i32
  }
  func.func @transform_1(%arg0: i32) -> (i32, i32) {
    %c0_i32 = arith.constant 0 : i32
    %c0_i32_0 = arith.constant 0 : i32
    %c0_i32_1 = arith.constant 0 : i32
    return %c0_i32, %c0_i32_0 : i32, i32
  }
  func.func @transform_2(%arg0: i32) -> (i32, i32) {
    %c0_i32 = arith.constant 0 : i32
    %c0_i32_0 = arith.constant 0 : i32
    return %arg0, %c0_i32 : i32, i32
  }
}

</mosaic_0001>

<llo_original>
// kernel: tpu_custom_call.1
$region0: #{tpu_custom_call.1}
  #allocation0 [shape = 'u32[]', space=smem, size = 0x4, offset = 0x4, fixed_abs, tag = 'smem constant byte address 0x4 - core index']
  #allocation1 [shape = 'u32[144,128]{1,0:T(1,128)}', space=vmem, size = 0x12000, scoped, tag = 'internal scratch']
  %s0 = inlined_call_operand.vmem [shape: s32[8,4], index: 0, kind: input, shape index: {}]
  %s1 = inlined_call_operand.hbm [shape: f32[40,128], index: 1, kind: input, shape index: {}]
  %s2 = inlined_call_operand.hbm [shape: f32[8,128], index: 2, kind: output, shape index: {}]
  %s3 = sld [smem:[#allocation0]]
  $region22: #{tpu_custom_call.1} parent=0
    _
  %s5 = ssub.s32 1, %s3
  %s6 = scalar_select 0, %s5, %s3
  $region1: #{tpu_custom_call.1} parent=0
    #allocation2 [shape = 'u8[20480]{0}', space=vmem, size = 0x5000, scoped, tag = 'input window, operand 1, single buffered']
    #allocation3 [shape = 's32[1]{0}', space=sflag, size = 0x4, scoped, tag = 'scoped memory for tpu_custom_call.1']
    #allocation4 [shape = 's32[1]{0}', space=sflag, size = 0x4, scoped, tag = 'scoped memory for tpu_custom_call.1']
    #allocation5 [shape = 'u8[4096]{0}', space=vmem, size = 0x1000, scoped, tag = 'output window, operand 0, single buffered']
    %7 = vsyncpa [#allocation3], 0
    %8 = vsyncpa [#allocation4], 0
    // Predicated region
    $region2: #{tpu_custom_call.1} parent=1 // pred_check
      _
    $region3: #{tpu_custom_call.1} parent=1 // pred_check_branch
      %10 = sbr.rel (0) target = $region5
    $region4: #{tpu_custom_call.1} parent=1 // pred_region
      _
    $region5: #{tpu_custom_call.1} parent=1 // pred_fallthru
      _
    // Predicated region
    $region6: #{tpu_custom_call.1} parent=1 // pred_check
      _
    $region7: #{tpu_custom_call.1} parent=1 // pred_check_branch
      %12 = sbr.rel (0) target = $region9
    $region8: #{tpu_custom_call.1} parent=1 // pred_region
      %s14 = ssub.s32 640, 640
      %15 = vsyncadd [#allocation3], %s14
      %s16 = sshll.u32 [#allocation2], 4
      %s17 = int_to_ptr.vmem [resolvable:$true] %s16
      %22 = dma.hbm_to_vmem [thread:$0]  %s1, 640, %s17, [#allocation3], 128, 128, 8
    $region9: #{tpu_custom_call.1} parent=1 // pred_fallthru
      _
    // Predicated region
    $region10: #{tpu_custom_call.1} parent=1 // pred_check
      _
    $region11: #{tpu_custom_call.1} parent=1 // pred_check_branch
      %24 = sbr.rel (0) target = $region13
    $region12: #{tpu_custom_call.1} parent=1 // pred_region
      %25 = dma.done [#allocation3], 640
    $region13: #{tpu_custom_call.1} parent=1 // pred_fallthru
      _
    %v26 = vld [vmem:[%s0] sm:$0xff]
    %v27 = vlaneseq
    %v28 = vand.u32 %v27, 127
    %29 = vset.pattern.permute.xlu0 0
    %30 = vperm.xlu0 %29, %v26
    %v31 = vpop.permute.xlu0 %30
    %vm32 = vcmp.eq.s32.totalorder %v28, %v31
    %v33 = vsel %vm32, 1, 0
    %v34 = vcvt.s32.f32 %v33
    %v35 = vadd.f32 %v34, 0.0
    %36 = vset.pattern.permute.xlu0 1
    %37 = vperm.xlu0 %36, %v26
    %v38 = vpop.permute.xlu0 %37
    %vm39 = vcmp.eq.s32.totalorder %v28, %v38
    %v40 = vsel %vm39, 1, 0
    %v41 = vcvt.s32.f32 %v40
    %v42 = vadd.f32 %v35, %v41
    %43 = vset.pattern.permute.xlu0 2
    %44 = vperm.xlu0 %43, %v26
    %v45 = vpop.permute.xlu0 %44
    %vm46 = vcmp.eq.s32.totalorder %v28, %v45
    %v47 = vsel %vm46, 1, 0
    %v48 = vcvt.s32.f32 %v47
    %v49 = vadd.f32 %v42, %v48
    %50 = vset.pattern.permute.xlu0 3
    %51 = vperm.xlu0 %50, %v26
    %v52 = vpop.permute.xlu0 %51
    %vm53 = vcmp.eq.s32.totalorder %v28, %v52
    %v54 = vsel %vm53, 1, 0
    %v55 = vcvt.s32.f32 %v54
    %v56 = vadd.f32 %v49, %v55
    %v57 = vld [vmem:[#allocation2] sm:$0xff]
    %v58 = vld [vmem:[#allocation2 + $0x8] sm:$0xff]
    %v59 = vld [vmem:[#allocation2 + $0x10] sm:$0xff]
    %v60 = vld [vmem:[#allocation2 + $0x18] sm:$0xff]
    %v61 = vld [vmem:[#allocation2 + $0x20] sm:$0xff]
    %vm62 = vcmask 326656
    %v64 = vsel %vm62, %v56, 0
    %66 = vmatprep.subr.mxu0 0.0
    %67 = vmatpush1.msra.mxu0 %v57
    %68 = vmatprep.subr.mxu0 0.0
    %69 = vmatpush1.msra.mxu0 %v58
    %70 = vmatprep.subr.mxu0 0.0
    %71 = vmatpush1.msra.mxu0 %v59
    %72 = vmatprep.subr.mxu0 0.0
    %73 = vmatpush1.msra.mxu0 %v60
    %74 = vmatprep.subr.mxu0 0.0
    %75 = vmatpush1.msra.mxu0 %v61
    %76 = vmatprep.subr.mxu0 0.0
    %77 = vmatpush1.msra.mxu0 0.0
    %78 = vmatprep.subr.mxu0 0.0
    %79 = vmatpush1.msra.mxu0 0.0
    %80 = vmatprep.subr.mxu0 0.0
    %81 = vmatpush1.msra.mxu0 0.0
    %82 = vmatprep.subr.mxu0 0.0
    %83 = vmatpush1.msra.mxu0 0.0
    %84 = vmatprep.subr.mxu0 0.0
    %85 = vmatpush1.msra.mxu0 0.0
    %86 = vmatprep.subr.mxu0 0.0
    %87 = vmatpush1.msra.mxu0 0.0
    %88 = vmatprep.subr.mxu0 0.0
    %89 = vmatpush1.msra.mxu0 0.0
    %90 = vmatprep.subr.mxu0 0.0
    %91 = vmatpush1.msra.mxu0 0.0
    %92 = vmatprep.subr.mxu0 0.0
    %93 = vmatpush1.msra.mxu0 0.0
    %94 = vmatprep.subr.mxu0 0.0
    %95 = vmatpush1.msra.mxu0 0.0
    %96 = vmatprep.subr.mxu0 0.0
    %97 = vmatpush1.msra.mxu0 0.0
    %98 = vmatprep.subr.mxu0 0.0
    %99 = vmatpush1.msra.mxu0 0.0
    %100 = vmatprep.subr.mxu0 0.0
    %101 = vmatpush1.msra.mxu0 0.0
    %102 = vmatprep.subr.mxu0 0.0
    %103 = vmatpush1.msra.mxu0 0.0
    %104 = vmatprep.subr.mxu0 0.0
    %105 = vmatpush1.msra.mxu0 0.0
    %106 = vmatprep.subr.mxu0 0.0
    %107 = vmatpush1.msra.mxu0 0.0
    %108 = vmatprep.subr.mxu0 0.0
    %109 = vmatpush1.msra.mxu0 0.0
    %110 = vmatprep.subr.mxu0 0.0
    %111 = vmatpush1.msra.mxu0 0.0
    %112 = vmatprep.subr.mxu0 0.0
    %113 = vmatpush1.msra.mxu0 0.0
    %114 = vmatprep.subr.mxu0 0.0
    %115 = vmatpush1.msra.mxu0 0.0
    %116 = vmatprep.subr.mxu0 0.0
    %117 = vmatpush1.msra.mxu0 0.0
    %118 = vmatprep.subr.mxu0 0.0
    %119 = vmatpush1.msra.mxu0 0.0
    %120 = vmatprep.subr.mxu0 0.0
    %121 = vmatpush1.msra.mxu0 0.0
    %122 = vmatprep.subr.mxu0 0.0
    %123 = vmatpush1.msra.mxu0 0.0
    %124 = vmatprep.subr.mxu0 0.0
    %125 = vmatpush1.msra.mxu0 0.0
    %126 = vmatprep.subr.mxu0 0.0
    %127 = vmatpush1.msra.mxu0 0.0
    %128 = vmatprep.subr.mxu0 0.0
    %129 = vmatpush1.msra.mxu0 0.0
    %130 = vmatprep.mubr.f32.mxu0 0.0
    %131 = vmatmul.mubr.f32.gmra.mrb[0].mxu0 %v64
    %v132 = vpop.f32.mrb[0].mxu0
    %v133 = vadd.f32 0.0, %v132
    %v134 = vpop.f32.mrb[0].mxu0
    %135 = vdwg.mxu0
    %136 = vst [vmem:[#allocation5] sm:$0xff] %v133
    // Predicated region
    $region14: #{tpu_custom_call.1} parent=1 // pred_check
      _
    $region15: #{tpu_custom_call.1} parent=1 // pred_check_branch
      %138 = sbr.rel (0) target = $region17
    $region16: #{tpu_custom_call.1} parent=1 // pred_region
      %s140 = ssub.s32 128, 128
      %141 = vsyncadd [#allocation4], %s140
      %s143 = sshll.u32 [#allocation5], 4
      %s144 = int_to_ptr.vmem [resolvable:$true] %s143
      %146 = dma.vmem_to_hbm [thread:$0]  %s144, 128, %s2, [#allocation4]
    $region17: #{tpu_custom_call.1} parent=1 // pred_fallthru
      _
    // Predicated region
    $region18: #{tpu_custom_call.1} parent=1 // pred_check
      _
    $region19: #{tpu_custom_call.1} parent=1 // pred_check_branch
      %148 = sbr.rel (0) target = $region21
    $region20: #{tpu_custom_call.1} parent=1 // pred_region
      %149 = dma.done [#allocation4], 128
    $region21: #{tpu_custom_call.1} parent=1 // pred_fallthru
      _
    %150 = vsyncpa [#allocation3], 1
    %151 = vsyncpa [#allocation4], 1

</llo_original>
